<compile_context>
chip_gen: v7x
topology: tpu7x:2x2x1
jax: 0.10.0
libtpu: 0.0.40
codegen_flags: <defaults>
</compile_context>

<pallas_src>
import functools
import math

import jax
import jax.numpy as jnp
from jax.experimental import pallas as pl
from jax.experimental.pallas import tpu as pltpu


# ----------------------------------------------------------------------------
# Pallas kernel: fully fused MLP (encoder + discriminator)
# ----------------------------------------------------------------------------
def _fused_mlp_kernel(*refs, acts, n_enc):
    """refs = (x_ref, w0, b0, w1, b1, ..., w_{L-1}, b_{L-1}, nf_ref, out_ref)."""
    n_layers = len(acts)
    x_ref = refs[0]
    wb = refs[1:1 + 2 * n_layers]
    nf_ref = refs[1 + 2 * n_layers]
    out_ref = refs[2 + 2 * n_layers]

    h = x_ref[...]                      # bf16 row tile, stays in vregs/VMEM
    for i, act in enumerate(acts):
        w = wb[2 * i][...]              # (in_i, out_i) bf16, VMEM-resident
        b = wb[2 * i + 1][...]          # (1, out_i) f32
        y = jnp.dot(h.astype(w.dtype), w,
                    preferred_element_type=jnp.float32) + b
        if act == "tanh":
            y = jnp.tanh(y)
        elif act == "relu":
            y = jnp.maximum(y, 0.0)
        elif act == "sigmoid":
            # exp -> EUP; approx reciprocal -> EUP (keeps VALU free).
            y = pl.reciprocal(1.0 + jnp.exp(-y), approx=True)
            y = jnp.clip(y, 0.0, 1.0)
        elif act == "none":
            pass
        else:
            raise ValueError(act)
        h = y
        if i == n_enc - 1:              # encoder output == new_features
            nf_ref[...] = y.astype(nf_ref.dtype)
    out_ref[...] = h.astype(out_ref.dtype)


def _fused_forward(x, layers, acts, n_enc):
    """Run the whole MLP in one pallas_call. layers = [(w, b), ...]."""
    n, in_f = x.shape
    nf_dim = layers[n_enc - 1][0].shape[1]
    out_dim = layers[-1][0].shape[1]

    # Row tile: 512 rows at large N (double-buffered DMA, fits any-gen VMEM
    # incl. v7x 64 MiB); at small N just round up to a sublane multiple of 8.
    if n >= 512:
        tile = 512
    else:
        tile = max(8, ((n + 7) // 8) * 8)
    n_pad = ((n + tile - 1) // tile) * tile
    grid = (n_pad // tile,)

    x_b = x.astype(jnp.bfloat16)
    if n_pad != n:
        x_b = jnp.pad(x_b, ((0, n_pad - n), (0, 0)))

    flat_inputs = [x_b]
    in_specs = [pl.BlockSpec((tile, in_f), lambda i: (i, 0))]
    for w, b in layers:
        flat_inputs.append(w.astype(jnp.bfloat16))
        flat_inputs.append(b.reshape(1, -1).astype(jnp.float32))
        # Weights/biases: full-array blocks, constant index_map -> VMEM-resident.
        in_specs.append(pl.BlockSpec(tuple(w.shape), lambda i: (0, 0)))
        in_specs.append(pl.BlockSpec((1, b.shape[-1]), lambda i: (0, 0)))

    out_shapes = (jax.ShapeDtypeStruct((n_pad, nf_dim), jnp.float32),
                  jax.ShapeDtypeStruct((n_pad, out_dim), jnp.float32))
    out_specs = (pl.BlockSpec((tile, nf_dim), lambda i: (i, 0)),
                 pl.BlockSpec((tile, out_dim), lambda i: (i, 0)))

    # Advisory cost estimate for XLA's scheduler.
    flops = 2 * n_pad * sum(w.shape[0] * w.shape[1] for w, _ in layers)
    transcendentals = n_pad * sum(w.shape[1] for w, _ in layers)
    bytes_accessed = (
        n_pad * in_f * 2
        + sum(w.size * 2 + b.size * 4 for w, b in layers)
        + n_pad * (nf_dim + out_dim) * 4)

    kernel = functools.partial(_fused_mlp_kernel, acts=acts, n_enc=n_enc)
    nf, out = pl.pallas_call(
        kernel,
        grid=grid,
        in_specs=in_specs,
        out_specs=out_specs,
        out_shape=out_shapes,
        compiler_params=pltpu.CompilerParams(
            dimension_semantics=("parallel",)),
        cost_estimate=pl.CostEstimate(flops=flops,
                                      transcendentals=transcendentals,
                                      bytes_accessed=bytes_accessed),
    )(*flat_inputs)
    return nf[:n], out[:n]


# ----------------------------------------------------------------------------
# Parameter construction (deterministic, mirrors controversialnet2.__init__)
# ----------------------------------------------------------------------------
def _binary_weight(key, in_f, out_f):
    # (xavier_uniform(gain=relu).sign() + 1) / 2  ->  binary {0,1} weights.
    # The xavier bound only scales magnitude, so the sign pattern is just the
    # sign of a symmetric uniform draw. Values {0, 0.5, 1} are exact in bf16.
    u = jax.random.uniform(key, (in_f, out_f), minval=-1.0, maxval=1.0,
                           dtype=jnp.float32)
    return ((jnp.sign(u) + 1.0) / 2.0).astype(jnp.bfloat16)


def _default_bias(key, in_f, out_f):
    bound = 1.0 / math.sqrt(in_f)
    return jax.random.uniform(key, (out_f,), minval=-bound, maxval=bound,
                              dtype=jnp.float32)


def make_params(key, in_feats1, hidden_feats1, hidden_feats2, bias=True):
    """Params pytree contains ONLY arrays (activation kinds are structural)."""
    params = {"encoder": [], "discriminator": []}

    # encoder: Linear(+bias) every layer; Tanh+Dropout on all but last.
    dims_e = [in_feats1] + list(hidden_feats1)
    for i in range(len(hidden_feats1)):
        key, kw, kb = jax.random.split(key, 3)
        w = _binary_weight(kw, dims_e[i], dims_e[i + 1])
        b = (_default_bias(kb, dims_e[i], dims_e[i + 1]) if bias
             else jnp.zeros((dims_e[i + 1],), jnp.float32))
        params["encoder"].append((w, b))

    # discriminator: Linear+ReLU+Dropout except last: Linear(no bias)+Sigmoid.
    dims_d = [hidden_feats1[-1]] + list(hidden_feats2)
    for i in range(len(hidden_feats2)):
        key, kw, kb = jax.random.split(key, 3)
        last = i == len(hidden_feats2) - 1
        w = _binary_weight(kw, dims_d[i], dims_d[i + 1])
        if last or not bias:
            b = jnp.zeros((dims_d[i + 1],), jnp.float32)
        else:
            b = _default_bias(kb, dims_d[i], dims_d[i + 1])
        params["discriminator"].append((w, b))

    return params


# ----------------------------------------------------------------------------
# Forward pass: (new_features, output)
# ----------------------------------------------------------------------------
@jax.jit
def controversialnet2_forward(node_forces, params):
    enc = list(params["encoder"])
    dis = list(params["discriminator"])
    n_enc = len(enc)
    n_dis = len(dis)
    # Activation kinds are static (derived from structure, not stored in pytree).
    acts = tuple("tanh" if i < n_enc - 1 else "none" for i in range(n_enc)) + \
           tuple("relu" if i < n_dis - 1 else "sigmoid" for i in range(n_dis))
    layers = enc + dis
    x = node_forces.astype(jnp.float32)
    # Dropout(0.25/0.5) == identity (eval-mode).  # TODO(synk): training dropout.
    return _fused_forward(x, layers, acts, n_enc)


# ----------------------------------------------------------------------------
if __name__ == "__main__":
    # Small shapes consistent with the module.
    in_feats1 = 16
    hidden_feats1 = [32, 16, 8]
    hidden_feats2 = [16, 8, 1]
    n_nodes = 8

    key = jax.random.PRNGKey(0)
    key, kx, kp = jax.random.split(key, 3)

    node_forces = jax.random.normal(kx, (n_nodes, in_feats1), dtype=jnp.float32)
    params = make_params(kp, in_feats1, hidden_feats1, hidden_feats2, bias=True)

    new_features, output = controversialnet2_forward(node_forces, params)
    jax.block_until_ready((new_features, output))

    # Shape / range sanity.
    assert new_features.shape == (n_nodes, hidden_feats1[-1])
    assert output.shape == (n_nodes, hidden_feats2[-1])
    assert bool(jnp.all(jnp.isfinite(new_features)))
    assert bool(jnp.all((output >= 0.0) & (output <= 1.0)))

    # Pure-JAX reference (f32) — loose tolerance because kernel uses bf16 inputs.
    def ref_forward(x, params):
        h = x.astype(jnp.float32)
        enc = params["encoder"]; dis = params["discriminator"]
        for i, (w, b) in enumerate(enc):
            h = h @ w.astype(jnp.float32) + b
            if i < len(enc) - 1:
                h = jnp.tanh(h)
        nf = h
        for i, (w, b) in enumerate(dis):
            h = h @ w.astype(jnp.float32) + b
            h = jax.nn.sigmoid(h) if i == len(dis) - 1 else jnp.maximum(h, 0.0)
        return nf, h

    nf_ref, out_ref = ref_forward(node_forces, params)
    assert bool(jnp.allclose(new_features, nf_ref, atol=2e-1, rtol=5e-2))
    assert bool(jnp.allclose(output, out_ref, atol=2e-1, rtol=5e-2))

    print("KERNEL_OK")
</pallas_src>

<mosaic_0001>
module attributes {stable_mosaic.version = 11 : i64} {
  func.func @_fused_mlp_kernel(%arg0: i32, %arg1: memref<8x16xbf16, #tpu.memory_space<vmem>>, %arg2: memref<16x32xbf16, #tpu.memory_space<vmem>>, %arg3: memref<1x32xf32, #tpu.memory_space<vmem>>, %arg4: memref<32x16xbf16, #tpu.memory_space<vmem>>, %arg5: memref<1x16xf32, #tpu.memory_space<vmem>>, %arg6: memref<16x8xbf16, #tpu.memory_space<vmem>>, %arg7: memref<1x8xf32, #tpu.memory_space<vmem>>, %arg8: memref<8x16xbf16, #tpu.memory_space<vmem>>, %arg9: memref<1x16xf32, #tpu.memory_space<vmem>>, %arg10: memref<16x8xbf16, #tpu.memory_space<vmem>>, %arg11: memref<1x8xf32, #tpu.memory_space<vmem>>, %arg12: memref<8x1xbf16, #tpu.memory_space<vmem>>, %arg13: memref<1x1xf32, #tpu.memory_space<vmem>>, %arg14: memref<8x8xf32, #tpu.memory_space<vmem>>, %arg15: memref<8x1xf32, #tpu.memory_space<vmem>>) attributes {dimension_semantics = [#tpu.dimension_semantics<parallel>], iteration_bounds = array<i64: 1>, scalar_prefetch = 0 : i64, scratch_operands = 0 : i64, tpu.core_type = #tpu.core_type<tc>, window_params = [{transform_indices = @transform_0, window_bounds = array<i64: 8, 16>}, {pipeline_mode = #tpu.pipeline_mode<synchronous>, transform_indices = @transform_1, window_bounds = array<i64: 16, 32>}, {pipeline_mode = #tpu.pipeline_mode<synchronous>, transform_indices = @transform_2, window_bounds = array<i64: 1, 32>}, {pipeline_mode = #tpu.pipeline_mode<synchronous>, transform_indices = @transform_3, window_bounds = array<i64: 32, 16>}, {pipeline_mode = #tpu.pipeline_mode<synchronous>, transform_indices = @transform_4, window_bounds = array<i64: 1, 16>}, {pipeline_mode = #tpu.pipeline_mode<synchronous>, transform_indices = @transform_5, window_bounds = array<i64: 16, 8>}, {pipeline_mode = #tpu.pipeline_mode<synchronous>, transform_indices = @transform_6, window_bounds = array<i64: 1, 8>}, {pipeline_mode = #tpu.pipeline_mode<synchronous>, transform_indices = @transform_7, window_bounds = array<i64: 8, 16>}, {pipeline_mode = #tpu.pipeline_mode<synchronous>, transform_indices = @transform_8, window_bounds = array<i64: 1, 16>}, {pipeline_mode = #tpu.pipeline_mode<synchronous>, transform_indices = @transform_9, window_bounds = array<i64: 16, 8>}, {pipeline_mode = #tpu.pipeline_mode<synchronous>, transform_indices = @transform_10, window_bounds = array<i64: 1, 8>}, {pipeline_mode = #tpu.pipeline_mode<synchronous>, transform_indices = @transform_11, window_bounds = array<i64: 8, 1>}, {pipeline_mode = #tpu.pipeline_mode<synchronous>, transform_indices = @transform_12, window_bounds = array<i64: 1, 1>}, {transform_indices = @transform_13, window_bounds = array<i64: 8, 8>}, {transform_indices = @transform_14, window_bounds = array<i64: 8, 1>}]} {
    %c0 = arith.constant 0 : index
    %c0_0 = arith.constant 0 : index
    %0 = vector.load %arg1[%c0, %c0_0] : memref<8x16xbf16, #tpu.memory_space<vmem>>, vector<8x16xbf16>
    %c0_1 = arith.constant 0 : index
    %c0_2 = arith.constant 0 : index
    %1 = vector.load %arg2[%c0_1, %c0_2] : memref<16x32xbf16, #tpu.memory_space<vmem>>, vector<16x32xbf16>
    %c0_3 = arith.constant 0 : index
    %c0_4 = arith.constant 0 : index
    %2 = vector.load %arg3[%c0_3, %c0_4] : memref<1x32xf32, #tpu.memory_space<vmem>>, vector<1x32xf32>
    %cst = arith.constant dense<0.000000e+00> : vector<8x32xf32>
    %3 = tpu.matmul %0, %1, %cst {dimension_numbers = #tpu.dot_dimension_numbers<[1], [0], [0], [1], [0, 0, 1, 1], [], []>} : vector<8x16xbf16>, vector<16x32xbf16>, vector<8x32xf32> -> vector<8x32xf32>
    %4 = vector.broadcast %2 : vector<1x32xf32> to vector<8x32xf32>
    %5 = arith.addf %3, %4 : vector<8x32xf32>
    %6 = math.tanh %5 : vector<8x32xf32>
    %c0_5 = arith.constant 0 : index
    %c0_6 = arith.constant 0 : index
    %7 = vector.load %arg4[%c0_5, %c0_6] : memref<32x16xbf16, #tpu.memory_space<vmem>>, vector<32x16xbf16>
    %c0_7 = arith.constant 0 : index
    %c0_8 = arith.constant 0 : index
    %8 = vector.load %arg5[%c0_7, %c0_8] : memref<1x16xf32, #tpu.memory_space<vmem>>, vector<1x16xf32>
    %9 = arith.truncf %6 : vector<8x32xf32> to vector<8x32xbf16>
    %cst_9 = arith.constant dense<0.000000e+00> : vector<8x16xf32>
    %10 = tpu.matmul %9, %7, %cst_9 {dimension_numbers = #tpu.dot_dimension_numbers<[1], [0], [0], [1], [0, 0, 1, 1], [], []>} : vector<8x32xbf16>, vector<32x16xbf16>, vector<8x16xf32> -> vector<8x16xf32>
    %11 = vector.broadcast %8 : vector<1x16xf32> to vector<8x16xf32>
    %12 = arith.addf %10, %11 : vector<8x16xf32>
    %13 = math.tanh %12 : vector<8x16xf32>
    %c0_10 = arith.constant 0 : index
    %c0_11 = arith.constant 0 : index
    %14 = vector.load %arg6[%c0_10, %c0_11] : memref<16x8xbf16, #tpu.memory_space<vmem>>, vector<16x8xbf16>
    %c0_12 = arith.constant 0 : index
    %c0_13 = arith.constant 0 : index
    %15 = vector.load %arg7[%c0_12, %c0_13] : memref<1x8xf32, #tpu.memory_space<vmem>>, vector<1x8xf32>
    %16 = arith.truncf %13 : vector<8x16xf32> to vector<8x16xbf16>
    %cst_14 = arith.constant dense<0.000000e+00> : vector<8x8xf32>
    %17 = tpu.matmul %16, %14, %cst_14 {dimension_numbers = #tpu.dot_dimension_numbers<[1], [0], [0], [1], [0, 0, 1, 1], [], []>} : vector<8x16xbf16>, vector<16x8xbf16>, vector<8x8xf32> -> vector<8x8xf32>
    %18 = vector.broadcast %15 : vector<1x8xf32> to vector<8x8xf32>
    %19 = arith.addf %17, %18 : vector<8x8xf32>
    %c0_15 = arith.constant 0 : index
    %c0_16 = arith.constant 0 : index
    %20 = vector.load %arg14[%c0_15, %c0_16] : memref<8x8xf32, #tpu.memory_space<vmem>>, vector<8x8xf32>
    tpu.vector_store %arg14[%c0_15, %c0_16], %19 {strides = array<i32>} : memref<8x8xf32, #tpu.memory_space<vmem>>, vector<8x8xf32>,
    %c0_17 = arith.constant 0 : index
    %c0_18 = arith.constant 0 : index
    %21 = vector.load %arg8[%c0_17, %c0_18] : memref<8x16xbf16, #tpu.memory_space<vmem>>, vector<8x16xbf16>
    %c0_19 = arith.constant 0 : index
    %c0_20 = arith.constant 0 : index
    %22 = vector.load %arg9[%c0_19, %c0_20] : memref<1x16xf32, #tpu.memory_space<vmem>>, vector<1x16xf32>
    %23 = arith.truncf %19 : vector<8x8xf32> to vector<8x8xbf16>
    %cst_21 = arith.constant dense<0.000000e+00> : vector<8x16xf32>
    %24 = tpu.matmul %23, %21, %cst_21 {dimension_numbers = #tpu.dot_dimension_numbers<[1], [0], [0], [1], [0, 0, 1, 1], [], []>} : vector<8x8xbf16>, vector<8x16xbf16>, vector<8x16xf32> -> vector<8x16xf32>
    %25 = vector.broadcast %22 : vector<1x16xf32> to vector<8x16xf32>
    %26 = arith.addf %24, %25 : vector<8x16xf32>
    %cst_22 = arith.constant 0.000000e+00 : f32
    %27 = vector.broadcast %cst_22 : f32 to vector<8x16xf32>
    %28 = arith.maximumf %26, %27 : vector<8x16xf32>
    %c0_23 = arith.constant 0 : index
    %c0_24 = arith.constant 0 : index
    %29 = vector.load %arg10[%c0_23, %c0_24] : memref<16x8xbf16, #tpu.memory_space<vmem>>, vector<16x8xbf16>
    %c0_25 = arith.constant 0 : index
    %c0_26 = arith.constant 0 : index
    %30 = vector.load %arg11[%c0_25, %c0_26] : memref<1x8xf32, #tpu.memory_space<vmem>>, vector<1x8xf32>
    %31 = arith.truncf %28 : vector<8x16xf32> to vector<8x16xbf16>
    %cst_27 = arith.constant dense<0.000000e+00> : vector<8x8xf32>
    %32 = tpu.matmul %31, %29, %cst_27 {dimension_numbers = #tpu.dot_dimension_numbers<[1], [0], [0], [1], [0, 0, 1, 1], [], []>} : vector<8x16xbf16>, vector<16x8xbf16>, vector<8x8xf32> -> vector<8x8xf32>
    %33 = vector.broadcast %30 : vector<1x8xf32> to vector<8x8xf32>
    %34 = arith.addf %32, %33 : vector<8x8xf32>
    %cst_28 = arith.constant 0.000000e+00 : f32
    %35 = vector.broadcast %cst_28 : f32 to vector<8x8xf32>
    %36 = arith.maximumf %34, %35 : vector<8x8xf32>
    %c0_29 = arith.constant 0 : index
    %c0_30 = arith.constant 0 : index
    %37 = vector.load %arg12[%c0_29, %c0_30] : memref<8x1xbf16, #tpu.memory_space<vmem>>, vector<8x1xbf16>
    %c0_31 = arith.constant 0 : index
    %c0_32 = arith.constant 0 : index
    %38 = vector.load %arg13[%c0_31, %c0_32] : memref<1x1xf32, #tpu.memory_space<vmem>>, vector<1x1xf32>
    %39 = arith.truncf %36 : vector<8x8xf32> to vector<8x8xbf16>
    %cst_33 = arith.constant dense<0.000000e+00> : vector<8x1xf32>
    %40 = tpu.matmul %39, %37, %cst_33 {dimension_numbers = #tpu.dot_dimension_numbers<[1], [0], [0], [1], [0, 0, 1, 1], [], []>} : vector<8x8xbf16>, vector<8x1xbf16>, vector<8x1xf32> -> vector<8x1xf32>
    %41 = vector.broadcast %38 : vector<1x1xf32> to vector<8x1xf32>
    %42 = arith.addf %40, %41 : vector<8x1xf32>
    %cst_34 = arith.constant 0.000000e+00 : f32
    %43 = vector.broadcast %cst_34 : f32 to vector<8x1xf32>
    %44 = arith.subf %43, %42 : vector<8x1xf32>
    %45 = math.exp %44 : vector<8x1xf32>
    %cst_35 = arith.constant 1.000000e+00 : f32
    %46 = vector.broadcast %cst_35 : f32 to vector<8x1xf32>
    %47 = arith.addf %46, %45 : vector<8x1xf32>
    %48 = tpu.reciprocal %47 {approx = true} : vector<8x1xf32> -> vector<8x1xf32>
    %cst_36 = arith.constant 0.000000e+00 : f32
    %cst_37 = arith.constant 1.000000e+00 : f32
    %49 = vector.broadcast %cst_36 : f32 to vector<8x1xf32>
    %50 = arith.maximumf %49, %48 : vector<8x1xf32>
    %51 = vector.broadcast %cst_37 : f32 to vector<8x1xf32>
    %52 = arith.minimumf %51, %50 : vector<8x1xf32>
    %c0_38 = arith.constant 0 : index
    %c0_39 = arith.constant 0 : index
    %53 = vector.load %arg15[%c0_38, %c0_39] : memref<8x1xf32, #tpu.memory_space<vmem>>, vector<8x1xf32>
    tpu.vector_store %arg15[%c0_38, %c0_39], %52 {strides = array<i32>} : memref<8x1xf32, #tpu.memory_space<vmem>>, vector<8x1xf32>,
    return
  }
  func.func @transform_0(%arg0: i32) -> (i32, i32) {
    %c0_i32 = arith.constant 0 : i32
    %c0_i32_0 = arith.constant 0 : i32
    return %arg0, %c0_i32 : i32, i32
  }
  func.func @transform_1(%arg0: i32) -> (i32, i32) {
    %c0_i32 = arith.constant 0 : i32
    %c0_i32_0 = arith.constant 0 : i32
    %c0_i32_1 = arith.constant 0 : i32
    return %c0_i32, %c0_i32_0 : i32, i32
  }
  func.func @transform_2(%arg0: i32) -> (i32, i32) {
    %c0_i32 = arith.constant 0 : i32
    %c0_i32_0 = arith.constant 0 : i32
    %c0_i32_1 = arith.constant 0 : i32
    return %c0_i32, %c0_i32_0 : i32, i32
  }
  func.func @transform_3(%arg0: i32) -> (i32, i32) {
    %c0_i32 = arith.constant 0 : i32
    %c0_i32_0 = arith.constant 0 : i32
    %c0_i32_1 = arith.constant 0 : i32
    return %c0_i32, %c0_i32_0 : i32, i32
  }
  func.func @transform_4(%arg0: i32) -> (i32, i32) {
    %c0_i32 = arith.constant 0 : i32
    %c0_i32_0 = arith.constant 0 : i32
    %c0_i32_1 = arith.constant 0 : i32
    return %c0_i32, %c0_i32_0 : i32, i32
  }
  func.func @transform_5(%arg0: i32) -> (i32, i32) {
    %c0_i32 = arith.constant 0 : i32
    %c0_i32_0 = arith.constant 0 : i32
    %c0_i32_1 = arith.constant 0 : i32
    return %c0_i32, %c0_i32_0 : i32, i32
  }
  func.func @transform_6(%arg0: i32) -> (i32, i32) {
    %c0_i32 = arith.constant 0 : i32
    %c0_i32_0 = arith.constant 0 : i32
    %c0_i32_1 = arith.constant 0 : i32
    return %c0_i32, %c0_i32_0 : i32, i32
  }
  func.func @transform_7(%arg0: i32) -> (i32, i32) {
    %c0_i32 = arith.constant 0 : i32
    %c0_i32_0 = arith.constant 0 : i32
    %c0_i32_1 = arith.constant 0 : i32
    return %c0_i32, %c0_i32_0 : i32, i32
  }
  func.func @transform_8(%arg0: i32) -> (i32, i32) {
    %c0_i32 = arith.constant 0 : i32
    %c0_i32_0 = arith.constant 0 : i32
    %c0_i32_1 = arith.constant 0 : i32
    return %c0_i32, %c0_i32_0 : i32, i32
  }
  func.func @transform_9(%arg0: i32) -> (i32, i32) {
    %c0_i32 = arith.constant 0 : i32
    %c0_i32_0 = arith.constant 0 : i32
    %c0_i32_1 = arith.constant 0 : i32
    return %c0_i32, %c0_i32_0 : i32, i32
  }
  func.func @transform_10(%arg0: i32) -> (i32, i32) {
    %c0_i32 = arith.constant 0 : i32
    %c0_i32_0 = arith.constant 0 : i32
    %c0_i32_1 = arith.constant 0 : i32
    return %c0_i32, %c0_i32_0 : i32, i32
  }
  func.func @transform_11(%arg0: i32) -> (i32, i32) {
    %c0_i32 = arith.constant 0 : i32
    %c0_i32_0 = arith.constant 0 : i32
    %c0_i32_1 = arith.constant 0 : i32
    return %c0_i32, %c0_i32_0 : i32, i32
  }
  func.func @transform_12(%arg0: i32) -> (i32, i32) {
    %c0_i32 = arith.constant 0 : i32
    %c0_i32_0 = arith.constant 0 : i32
    %c0_i32_1 = arith.constant 0 : i32
    return %c0_i32, %c0_i32_0 : i32, i32
  }
  func.func @transform_13(%arg0: i32) -> (i32, i32) {
    %c0_i32 = arith.constant 0 : i32
    %c0_i32_0 = arith.constant 0 : i32
    return %arg0, %c0_i32 : i32, i32
  }
  func.func @transform_14(%arg0: i32) -> (i32, i32) {
    %c0_i32 = arith.constant 0 : i32
    %c0_i32_0 = arith.constant 0 : i32
    return %arg0, %c0_i32 : i32, i32
  }
}

</mosaic_0001>

<llo_original>
// kernel: controversialnet2_forward.1
$region0: #{controversialnet2_forward.1}
  #allocation0 [shape = 'u32[]', space=smem, size = 0x4, offset = 0x4, fixed_abs, tag = 'smem constant byte address 0x4 - core index']
  #allocation1 [shape = 'u32[144,128]{1,0:T(1,128)}', space=vmem, size = 0x12000, scoped, tag = 'internal scratch']
  #allocation2 [shape = 'f32[1,1]{1,0:T(1,128)S(1)}', space=vmem, size = 0x200, scoped, tag = 'scoped memory for controversialnet2_forward.1']
  %s0 = inlined_call_operand.vmem [shape: bf16[8,16], index: 0, kind: input, shape index: {}]
  %s1 = inlined_call_operand.vmem [shape: bf16[16,32], index: 1, kind: input, shape index: {}]
  %s2 = inlined_call_operand.vmem [shape: f32[1,32], index: 2, kind: input, shape index: {}]
  %s3 = inlined_call_operand.vmem [shape: bf16[32,16], index: 3, kind: input, shape index: {}]
  %s4 = inlined_call_operand.vmem [shape: f32[1,16], index: 4, kind: input, shape index: {}]
  %s5 = inlined_call_operand.vmem [shape: bf16[16,8], index: 5, kind: input, shape index: {}]
  %s6 = inlined_call_operand.vmem [shape: f32[1,8], index: 6, kind: input, shape index: {}]
  %s7 = inlined_call_operand.vmem [shape: bf16[8,16], index: 7, kind: input, shape index: {}]
  %s8 = inlined_call_operand.vmem [shape: f32[1,16], index: 8, kind: input, shape index: {}]
  %s9 = inlined_call_operand.vmem [shape: bf16[16,8], index: 9, kind: input, shape index: {}]
  %s10 = inlined_call_operand.vmem [shape: f32[1,8], index: 10, kind: input, shape index: {}]
  %s11 = inlined_call_operand.vmem [shape: bf16[8,1], index: 11, kind: input, shape index: {}]
  %s12 = inlined_call_operand.<no memory space> [shape: f32[1,1], index: 12, kind: input, shape index: {}]
  %s13 = inlined_call_operand.hbm [shape: f32[8,8], index: 13, kind: output, shape index: {0}]
  %s14 = inlined_call_operand.vmem [shape: f32[8,1], index: 14, kind: output, shape index: {1}]
  %15 = xla_tuple %s13, %s14
  %s16 = sld [smem:[#allocation0]]
  $region70: #{controversialnet2_forward.1} parent=0
    _
  %s18 = ssub.s32 1, %s16
  %s19 = scalar_select 0, %s18, %s16
  %v20 = vstv %s12
  %21 = vst [vmem:[#allocation2] sm:$0x1] %v20
  $region1: #{controversialnet2_forward.1} parent=0
    #allocation3 [shape = 'u8[4096]{0}', space=vmem, size = 0x1000, scoped, tag = 'output window, operand 0, single buffered']
    #allocation4 [shape = 's32[1]{0}', space=sflag, size = 0x4, scoped, tag = 'scoped memory for controversialnet2_forward.1']
    %22 = vsyncpa [#allocation4], 0
    // Predicated region
    $region2: #{controversialnet2_forward.1} parent=1 // pred_check
      _
    $region3: #{controversialnet2_forward.1} parent=1 // pred_check_branch
      %24 = sbr.rel (0) target = $region5
    $region4: #{controversialnet2_forward.1} parent=1 // pred_region
      _
    $region5: #{controversialnet2_forward.1} parent=1 // pred_fallthru
      _
    // Predicated region
    $region6: #{controversialnet2_forward.1} parent=1 // pred_check
      _
    $region7: #{controversialnet2_forward.1} parent=1 // pred_check_branch
      %26 = sbr.rel (0) target = $region9
    $region8: #{controversialnet2_forward.1} parent=1 // pred_region
      _
    $region9: #{controversialnet2_forward.1} parent=1 // pred_fallthru
      _
    // Predicated region
    $region10: #{controversialnet2_forward.1} parent=1 // pred_check
      _
    $region11: #{controversialnet2_forward.1} parent=1 // pred_check_branch
      %28 = sbr.rel (0) target = $region13
    $region12: #{controversialnet2_forward.1} parent=1 // pred_region
      _
    $region13: #{controversialnet2_forward.1} parent=1 // pred_fallthru
      _
    // Predicated region
    $region14: #{controversialnet2_forward.1} parent=1 // pred_check
      _
    $region15: #{controversialnet2_forward.1} parent=1 // pred_check_branch
      %30 = sbr.rel (0) target = $region17
    $region16: #{controversialnet2_forward.1} parent=1 // pred_region
      _
    $region17: #{controversialnet2_forward.1} parent=1 // pred_fallthru
      _
    // Predicated region
    $region18: #{controversialnet2_forward.1} parent=1 // pred_check
      _
    $region19: #{controversialnet2_forward.1} parent=1 // pred_check_branch
      %32 = sbr.rel (0) target = $region21
    $region20: #{controversialnet2_forward.1} parent=1 // pred_region
      _
    $region21: #{controversialnet2_forward.1} parent=1 // pred_fallthru
      _
    // Predicated region
    $region22: #{controversialnet2_forward.1} parent=1 // pred_check
      _
    $region23: #{controversialnet2_forward.1} parent=1 // pred_check_branch
      %34 = sbr.rel (0) target = $region25
    $region24: #{controversialnet2_forward.1} parent=1 // pred_region
      _
    $region25: #{controversialnet2_forward.1} parent=1 // pred_fallthru
      _
    // Predicated region
    $region26: #{controversialnet2_forward.1} parent=1 // pred_check
      _
    $region27: #{controversialnet2_forward.1} parent=1 // pred_check_branch
      %36 = sbr.rel (0) target = $region29
    $region28: #{controversialnet2_forward.1} parent=1 // pred_region
      _
    $region29: #{controversialnet2_forward.1} parent=1 // pred_fallthru
      _
    // Predicated region
    $region30: #{controversialnet2_forward.1} parent=1 // pred_check
      _
    $region31: #{controversialnet2_forward.1} parent=1 // pred_check_branch
      %38 = sbr.rel (0) target = $region33
    $region32: #{controversialnet2_forward.1} parent=1 // pred_region
      _
    $region33: #{controversialnet2_forward.1} parent=1 // pred_fallthru
      _
    // Predicated region
    $region34: #{controversialnet2_forward.1} parent=1 // pred_check
      _
    $region35: #{controversialnet2_forward.1} parent=1 // pred_check_branch
      %40 = sbr.rel (0) target = $region37
    $region36: #{controversialnet2_forward.1} parent=1 // pred_region
      _
    $region37: #{controversialnet2_forward.1} parent=1 // pred_fallthru
      _
    // Predicated region
    $region38: #{controversialnet2_forward.1} parent=1 // pred_check
      _
    $region39: #{controversialnet2_forward.1} parent=1 // pred_check_branch
      %42 = sbr.rel (0) target = $region41
    $region40: #{controversialnet2_forward.1} parent=1 // pred_region
      _
    $region41: #{controversialnet2_forward.1} parent=1 // pred_fallthru
      _
    // Predicated region
    $region42: #{controversialnet2_forward.1} parent=1 // pred_check
      _
    $region43: #{controversialnet2_forward.1} parent=1 // pred_check_branch
      %44 = sbr.rel (0) target = $region45
    $region44: #{controversialnet2_forward.1} parent=1 // pred_region
      _
    $region45: #{controversialnet2_forward.1} parent=1 // pred_fallthru
      _
    // Predicated region
    $region46: #{controversialnet2_forward.1} parent=1 // pred_check
      _
    $region47: #{controversialnet2_forward.1} parent=1 // pred_check_branch
      %46 = sbr.rel (0) target = $region49
    $region48: #{controversialnet2_forward.1} parent=1 // pred_region
      _
    $region49: #{controversialnet2_forward.1} parent=1 // pred_fallthru
      _
    // Predicated region
    $region50: #{controversialnet2_forward.1} parent=1 // pred_check
      _
    $region51: #{controversialnet2_forward.1} parent=1 // pred_check_branch
      %48 = sbr.rel (0) target = $region53
    $region52: #{controversialnet2_forward.1} parent=1 // pred_region
      _
    $region53: #{controversialnet2_forward.1} parent=1 // pred_fallthru
      _
    %v50 = vld [vmem:[%s0] sm:$0xf]
    %v51 = vld [vmem:[%s1] sm:$0xf]
    %v52 = vld [vmem:[%s1 + $0x4] sm:$0xf]
    %v53 = vld [vmem:[%s2] sm:$0x1]
    %v55 = vlaneseq
    %v56 = vshrl.u32 %v55, 7
    %v57 = vsub.s32 0, %v56
    %v58 = vrot.slane %v53, %v57
    %v62 = vunpack.c.l.b16 %v51
    %v63 = vunpack.c.l.b16 %v52
    %v64 = vpack.c.b16 %v63, %v62
    %vm66 = vcmask 130048
    %v68 = vsel %vm66, %v50, 0
    %70 = vmatprep.subr.bf16.mxu0 0
    %71 = vmatpush1.bf16.msra.mxu0 %v64
    %72 = vmatprep.subr.bf16.mxu0 0
    %73 = vmatpush1.bf16.msra.mxu0 0
    %74 = vmatprep.subr.bf16.mxu0 0
    %75 = vmatpush1.bf16.msra.mxu0 0
    %76 = vmatprep.subr.bf16.mxu0 0
    %77 = vmatpush1.bf16.msra.mxu0 0
    %78 = vmatprep.subr.bf16.mxu0 0
    %79 = vmatpush1.bf16.msra.mxu0 0
    %80 = vmatprep.subr.bf16.mxu0 0
    %81 = vmatpush1.bf16.msra.mxu0 0
    %82 = vmatprep.subr.bf16.mxu0 0
    %83 = vmatpush1.bf16.msra.mxu0 0
    %84 = vmatprep.subr.bf16.mxu0 0
    %85 = vmatpush1.bf16.msra.mxu0 0
    %86 = vmatprep.subr.bf16.mxu0 0
    %87 = vmatpush1.bf16.msra.mxu0 0
    %88 = vmatprep.subr.bf16.mxu0 0
    %89 = vmatpush1.bf16.msra.mxu0 0
    %90 = vmatprep.subr.bf16.mxu0 0
    %91 = vmatpush1.bf16.msra.mxu0 0
    %92 = vmatprep.subr.bf16.mxu0 0
    %93 = vmatpush1.bf16.msra.mxu0 0
    %94 = vmatprep.subr.bf16.mxu0 0
    %95 = vmatpush1.bf16.msra.mxu0 0
    %96 = vmatprep.subr.bf16.mxu0 0
    %97 = vmatpush1.bf16.msra.mxu0 0
    %98 = vmatprep.subr.bf16.mxu0 0
    %99 = vmatpush1.bf16.msra.mxu0 0
    %100 = vmatprep.subr.bf16.mxu0 0
    %101 = vmatpush1.bf16.msra.mxu0 0
    %102 = vmatprep.mubr.bf16.mxu0 0
    %103 = vmatmul.mubr.bf16.gmra.mrb[0].mxu0 %v68
    %v104 = vpop.f32.mrb[0].mxu0
    %v105 = vadd.f32 %v58, %v104
    %v106 = vpop.f32.mrb[0].mxu0
    %v107 = vpop.f32.mrb[0].mxu0
    %v108 = vpop.f32.mrb[0].mxu0
    %109 = vdwg.mxu0
    %v110 = vtanh.pop %v105
    %v111 = vld [vmem:[%s3] sm:$0xf]
    %v112 = vld [vmem:[%s3 + $0x4] sm:$0xf]
    %v113 = vld [vmem:[%s3 + $0x8] sm:$0xf]
    %v114 = vld [vmem:[%s3 + $0xc] sm:$0xf]
    %v115 = vld [vmem:[%s4] sm:$0x1]
    %v116 = vpack.c.bf16 %v110, %v110
    %v118 = vlaneseq
    %v119 = vshrl.u32 %v118, 7
    %v120 = vsub.s32 0, %v119
    %v121 = vrot.slane %v115, %v120
    %v127 = vunpack.c.l.b16 %v111
    %v128 = vunpack.c.l.b16 %v112
    %v129 = vunpack.c.l.b16 %v113
    %v130 = vunpack.c.l.b16 %v114
    %v131 = vpack.c.b16 %v128, %v127
    %v132 = vpack.c.b16 %v130, %v129
    %vm135 = vcmask 261120
    %v137 = vsel %vm135, %v116, 0
    %139 = vmatprep.subr.bf16.mxu0 0
    %140 = vmatpush1.bf16.msra.mxu0 %v131
    %141 = vmatprep.subr.bf16.mxu0 0
    %142 = vmatpush1.bf16.msra.mxu0 %v132
    %143 = vmatprep.subr.bf16.mxu0 0
    %144 = vmatpush1.bf16.msra.mxu0 0
    %145 = vmatprep.subr.bf16.mxu0 0
    %146 = vmatpush1.bf16.msra.mxu0 0
    %147 = vmatprep.subr.bf16.mxu0 0
    %148 = vmatpush1.bf16.msra.mxu0 0
    %149 = vmatprep.subr.bf16.mxu0 0
    %150 = vmatpush1.bf16.msra.mxu0 0
    %151 = vmatprep.subr.bf16.mxu0 0
    %152 = vmatpush1.bf16.msra.mxu0 0
    %153 = vmatprep.subr.bf16.mxu0 0
    %154 = vmatpush1.bf16.msra.mxu0 0
    %155 = vmatprep.subr.bf16.mxu0 0
    %156 = vmatpush1.bf16.msra.mxu0 0
    %157 = vmatprep.subr.bf16.mxu0 0
    %158 = vmatpush1.bf16.msra.mxu0 0
    %159 = vmatprep.subr.bf16.mxu0 0
    %160 = vmatpush1.bf16.msra.mxu0 0
    %161 = vmatprep.subr.bf16.mxu0 0
    %162 = vmatpush1.bf16.msra.mxu0 0
    %163 = vmatprep.subr.bf16.mxu0 0
    %164 = vmatpush1.bf16.msra.mxu0 0
    %165 = vmatprep.subr.bf16.mxu0 0
    %166 = vmatpush1.bf16.msra.mxu0 0
    %167 = vmatprep.subr.bf16.mxu0 0
    %168 = vmatpush1.bf16.msra.mxu0 0
    %169 = vmatprep.subr.bf16.mxu0 0
    %170 = vmatpush1.bf16.msra.mxu0 0
    %171 = vmatprep.mubr.bf16.mxu0 0
    %172 = vmatmul.mubr.bf16.gmra.mrb[0].mxu0 %v137
    %v173 = vpop.f32.mrb[0].mxu0
    %v174 = vadd.f32 %v121, %v173
    %v175 = vpop.f32.mrb[0].mxu0
    %v176 = vpop.f32.mrb[0].mxu0
    %v177 = vpop.f32.mrb[0].mxu0
    %178 = vdwg.mxu0
    %v179 = vtanh.pop %v174
    %v180 = vld [vmem:[%s5] sm:$0xf]
    %v181 = vld [vmem:[%s5 + $0x4] sm:$0xf]
    %v182 = vld [vmem:[%s6] sm:$0x1]
    %v183 = vpack.c.bf16 %v179, %v179
    %v185 = vlaneseq
    %v186 = vshrl.u32 %v185, 7
    %v187 = vsub.s32 0, %v186
    %v188 = vrot.slane %v182, %v187
    %v192 = vunpack.c.l.b16 %v180
    %v193 = vunpack.c.l.b16 %v181
    %v194 = vpack.c.b16 %v193, %v192
    %v197 = vsel %vm66, %v183, 0
    %199 = vmatprep.subr.bf16.mxu0 0
    %200 = vmatpush1.bf16.msra.mxu0 %v194
    %201 = vmatprep.subr.bf16.mxu0 0
    %202 = vmatpush1.bf16.msra.mxu0 0
    %203 = vmatprep.subr.bf16.mxu0 0
    %204 = vmatpush1.bf16.msra.mxu0 0
    %205 = vmatprep.subr.bf16.mxu0 0
    %206 = vmatpush1.bf16.msra.mxu0 0
    %207 = vmatprep.subr.bf16.mxu0 0
    %208 = vmatpush1.bf16.msra.mxu0 0
    %209 = vmatprep.subr.bf16.mxu0 0
    %210 = vmatpush1.bf16.msra.mxu0 0
    %211 = vmatprep.subr.bf16.mxu0 0
    %212 = vmatpush1.bf16.msra.mxu0 0
    %213 = vmatprep.subr.bf16.mxu0 0
    %214 = vmatpush1.bf16.msra.mxu0 0
    %215 = vmatprep.subr.bf16.mxu0 0
    %216 = vmatpush1.bf16.msra.mxu0 0
    %217 = vmatprep.subr.bf16.mxu0 0
    %218 = vmatpush1.bf16.msra.mxu0 0
    %219 = vmatprep.subr.bf16.mxu0 0
    %220 = vmatpush1.bf16.msra.mxu0 0
    %221 = vmatprep.subr.bf16.mxu0 0
    %222 = vmatpush1.bf16.msra.mxu0 0
    %223 = vmatprep.subr.bf16.mxu0 0
    %224 = vmatpush1.bf16.msra.mxu0 0
    %225 = vmatprep.subr.bf16.mxu0 0
    %226 = vmatpush1.bf16.msra.mxu0 0
    %227 = vmatprep.subr.bf16.mxu0 0
    %228 = vmatpush1.bf16.msra.mxu0 0
    %229 = vmatprep.subr.bf16.mxu0 0
    %230 = vmatpush1.bf16.msra.mxu0 0
    %231 = vmatprep.mubr.bf16.mxu0 0
    %232 = vmatmul.mubr.bf16.gmra.mrb[0].mxu0 %v197
    %v233 = vpop.f32.mrb[0].mxu0
    %v234 = vadd.f32 %v188, %v233
    %v235 = vpop.f32.mrb[0].mxu0
    %v236 = vpop.f32.mrb[0].mxu0
    %v237 = vpop.f32.mrb[0].mxu0
    %238 = vdwg.mxu0
    %vm239 = vcmask 64512
    %240 = vst.msk [vmem:[#allocation3] sm:$0xff] %vm239, %v234
    %v241 = vld [vmem:[%s7] sm:$0xf]
    %v242 = vld [vmem:[%s8] sm:$0x1]
    %v243 = vpack.c.bf16 %v234, %v234
    %v245 = vlaneseq
    %v246 = vshrl.u32 %v245, 7
    %v247 = vsub.s32 0, %v246
    %v248 = vrot.slane %v242, %v247
    %v251 = vsel %vm239, %v243, 0
    %vm253 = vcmask 1043456
    %v255 = vsel %vm253, %v241, 0
    %257 = vmatprep.subr.bf16.mxu0 0
    %258 = vmatpush1.bf16.msra.mxu0 %v255
    %259 = vmatprep.subr.bf16.mxu0 0
    %260 = vmatpush1.bf16.msra.mxu0 0
    %261 = vmatprep.subr.bf16.mxu0 0
    %262 = vmatpush1.bf16.msra.mxu0 0
    %263 = vmatprep.subr.bf16.mxu0 0
    %264 = vmatpush1.bf16.msra.mxu0 0
    %265 = vmatprep.subr.bf16.mxu0 0
    %266 = vmatpush1.bf16.msra.mxu0 0
    %267 = vmatprep.subr.bf16.mxu0 0
    %268 = vmatpush1.bf16.msra.mxu0 0
    %269 = vmatprep.subr.bf16.mxu0 0
    %270 = vmatpush1.bf16.msra.mxu0 0
    %271 = vmatprep.subr.bf16.mxu0 0
    %272 = vmatpush1.bf16.msra.mxu0 0
    %273 = vmatprep.subr.bf16.mxu0 0
    %274 = vmatpush1.bf16.msra.mxu0 0
    %275 = vmatprep.subr.bf16.mxu0 0
    %276 = vmatpush1.bf16.msra.mxu0 0
    %277 = vmatprep.subr.bf16.mxu0 0
    %278 = vmatpush1.bf16.msra.mxu0 0
    %279 = vmatprep.subr.bf16.mxu0 0
    %280 = vmatpush1.bf16.msra.mxu0 0
    %281 = vmatprep.subr.bf16.mxu0 0
    %282 = vmatpush1.bf16.msra.mxu0 0
    %283 = vmatprep.subr.bf16.mxu0 0
    %284 = vmatpush1.bf16.msra.mxu0 0
    %285 = vmatprep.subr.bf16.mxu0 0
    %286 = vmatpush1.bf16.msra.mxu0 0
    %287 = vmatprep.subr.bf16.mxu0 0
    %288 = vmatpush1.bf16.msra.mxu0 0
    %289 = vmatprep.mubr.bf16.mxu0 0
    %290 = vmatmul.mubr.bf16.gmra.mrb[0].mxu0 %v251
    %v291 = vpop.f32.mrb[0].mxu0
    %v292 = vadd.f32 %v248, %v291
    %v293 = vpop.f32.mrb[0].mxu0
    %v294 = vpop.f32.mrb[0].mxu0
    %v295 = vpop.f32.mrb[0].mxu0
    %296 = vdwg.mxu0
    %v297 = vmax.f32 %v292, 0.0
    %v298 = vld [vmem:[%s9] sm:$0xf]
    %v299 = vld [vmem:[%s9 + $0x4] sm:$0xf]
    %v300 = vld [vmem:[%s10] sm:$0x1]
    %v301 = vpack.c.bf16 %v297, %v297
    %v303 = vlaneseq
    %v304 = vshrl.u32 %v303, 7
    %v305 = vsub.s32 0, %v304
    %v306 = vrot.slane %v300, %v305
    %v310 = vunpack.c.l.b16 %v298
    %v311 = vunpack.c.l.b16 %v299
    %v312 = vpack.c.b16 %v311, %v310
    %v315 = vsel %vm66, %v301, 0
    %317 = vmatprep.subr.bf16.mxu0 0
    %318 = vmatpush1.bf16.msra.mxu0 %v312
    %319 = vmatprep.subr.bf16.mxu0 0
    %320 = vmatpush1.bf16.msra.mxu0 0
    %321 = vmatprep.subr.bf16.mxu0 0
    %322 = vmatpush1.bf16.msra.mxu0 0
    %323 = vmatprep.subr.bf16.mxu0 0
    %324 = vmatpush1.bf16.msra.mxu0 0
    %325 = vmatprep.subr.bf16.mxu0 0
    %326 = vmatpush1.bf16.msra.mxu0 0
    %327 = vmatprep.subr.bf16.mxu0 0
    %328 = vmatpush1.bf16.msra.mxu0 0
    %329 = vmatprep.subr.bf16.mxu0 0
    %330 = vmatpush1.bf16.msra.mxu0 0
    %331 = vmatprep.subr.bf16.mxu0 0
    %332 = vmatpush1.bf16.msra.mxu0 0
    %333 = vmatprep.subr.bf16.mxu0 0
    %334 = vmatpush1.bf16.msra.mxu0 0
    %335 = vmatprep.subr.bf16.mxu0 0
    %336 = vmatpush1.bf16.msra.mxu0 0
    %337 = vmatprep.subr.bf16.mxu0 0
    %338 = vmatpush1.bf16.msra.mxu0 0
    %339 = vmatprep.subr.bf16.mxu0 0
    %340 = vmatpush1.bf16.msra.mxu0 0
    %341 = vmatprep.subr.bf16.mxu0 0
    %342 = vmatpush1.bf16.msra.mxu0 0
    %343 = vmatprep.subr.bf16.mxu0 0
    %344 = vmatpush1.bf16.msra.mxu0 0
    %345 = vmatprep.subr.bf16.mxu0 0
    %346 = vmatpush1.bf16.msra.mxu0 0
    %347 = vmatprep.subr.bf16.mxu0 0
    %348 = vmatpush1.bf16.msra.mxu0 0
    %349 = vmatprep.mubr.bf16.mxu0 0
    %350 = vmatmul.mubr.bf16.gmra.mrb[0].mxu0 %v315
    %v351 = vpop.f32.mrb[0].mxu0
    %v352 = vadd.f32 %v306, %v351
    %v353 = vpop.f32.mrb[0].mxu0
    %v354 = vpop.f32.mrb[0].mxu0
    %v355 = vpop.f32.mrb[0].mxu0
    %356 = vdwg.mxu0
    %v357 = vmax.f32 %v352, 0.0
    %v358 = vld [vmem:[%s11] sm:$0xf]
    %v359 = vld [vmem:[#allocation2] sm:$0x1]
    %v360 = vpack.c.bf16 %v357, %v357
    %v362 = vlaneseq
    %v363 = vshrl.u32 %v362, 7
    %v364 = vsub.s32 0, %v363
    %v365 = vrot.slane %v359, %v364
    %v368 = vsel %vm239, %v360, 0
    %v371 = vsel %vm253, %v358, 0
    %373 = vmatprep.subr.bf16.mxu0 0
    %374 = vmatpush1.bf16.msra.mxu0 %v371
    %375 = vmatprep.subr.bf16.mxu0 0
    %376 = vmatpush1.bf16.msra.mxu0 0
    %377 = vmatprep.subr.bf16.mxu0 0
    %378 = vmatpush1.bf16.msra.mxu0 0
    %379 = vmatprep.subr.bf16.mxu0 0
    %380 = vmatpush1.bf16.msra.mxu0 0
    %381 = vmatprep.subr.bf16.mxu0 0
    %382 = vmatpush1.bf16.msra.mxu0 0
    %383 = vmatprep.subr.bf16.mxu0 0
    %384 = vmatpush1.bf16.msra.mxu0 0
    %385 = vmatprep.subr.bf16.mxu0 0
    %386 = vmatpush1.bf16.msra.mxu0 0
    %387 = vmatprep.subr.bf16.mxu0 0
    %388 = vmatpush1.bf16.msra.mxu0 0
    %389 = vmatprep.subr.bf16.mxu0 0
    %390 = vmatpush1.bf16.msra.mxu0 0
    %391 = vmatprep.subr.bf16.mxu0 0
    %392 = vmatpush1.bf16.msra.mxu0 0
    %393 = vmatprep.subr.bf16.mxu0 0
    %394 = vmatpush1.bf16.msra.mxu0 0
    %395 = vmatprep.subr.bf16.mxu0 0
    %396 = vmatpush1.bf16.msra.mxu0 0
    %397 = vmatprep.subr.bf16.mxu0 0
    %398 = vmatpush1.bf16.msra.mxu0 0
    %399 = vmatprep.subr.bf16.mxu0 0
    %400 = vmatpush1.bf16.msra.mxu0 0
    %401 = vmatprep.subr.bf16.mxu0 0
    %402 = vmatpush1.bf16.msra.mxu0 0
    %403 = vmatprep.subr.bf16.mxu0 0
    %404 = vmatpush1.bf16.msra.mxu0 0
    %405 = vmatprep.mubr.bf16.mxu0 0
    %406 = vmatmul.mubr.bf16.gmra.mrb[0].mxu0 %v368
    %v407 = vpop.f32.mrb[0].mxu0
    %v408 = vadd.f32 %v365, %v407
    %v409 = vpop.f32.mrb[0].mxu0
    %v410 = vpop.f32.mrb[0].mxu0
    %v411 = vpop.f32.mrb[0].mxu0
    %412 = vdwg.mxu0
    %v413 = vsub.f32 0.0, %v408
    %v414 = vmul.f32 %v413, 1.442695
    %v415 = vpow.pop %v414
    %v416 = vadd.f32 %v415, 1.0
    %v417 = vrcp.pop %v416
    %v418 = vmax.f32 %v417, 0.0
    %v419 = vmin.f32 %v418, 1.0
    %vm420 = vcmask 7168
    %421 = vst.msk [vmem:[%s14] sm:$0xff] %vm420, %v419
    // Predicated region
    $region54: #{controversialnet2_forward.1} parent=1 // pred_check
      _
    $region55: #{controversialnet2_forward.1} parent=1 // pred_check_branch
      %423 = sbr.rel (0) target = $region57
    $region56: #{controversialnet2_forward.1} parent=1 // pred_region
      %s425 = ssub.s32 128, 128
      %426 = vsyncadd [#allocation4], %s425
      %s428 = sshll.u32 [#allocation3], 4
      %s429 = int_to_ptr.vmem [resolvable:$true] %s428
      %431 = dma.vmem_to_hbm [thread:$0]  %s429, 128, %s13, [#allocation4]
    $region57: #{controversialnet2_forward.1} parent=1 // pred_fallthru
      _
    // Predicated region
    $region58: #{controversialnet2_forward.1} parent=1 // pred_check
      _
    $region59: #{controversialnet2_forward.1} parent=1 // pred_check_branch
      %433 = sbr.rel (0) target = $region61
    $region60: #{controversialnet2_forward.1} parent=1 // pred_region
      _
    $region61: #{controversialnet2_forward.1} parent=1 // pred_fallthru
      _
    // Predicated region
    $region62: #{controversialnet2_forward.1} parent=1 // pred_check
      _
    $region63: #{controversialnet2_forward.1} parent=1 // pred_check_branch
      %435 = sbr.rel (0) target = $region65
    $region64: #{controversialnet2_forward.1} parent=1 // pred_region
      %436 = dma.done [#allocation4], 128
    $region65: #{controversialnet2_forward.1} parent=1 // pred_fallthru
      _
    // Predicated region
    $region66: #{controversialnet2_forward.1} parent=1 // pred_check
      _
    $region67: #{controversialnet2_forward.1} parent=1 // pred_check_branch
      %438 = sbr.rel (0) target = $region69
    $region68: #{controversialnet2_forward.1} parent=1 // pred_region
      _
    $region69: #{controversialnet2_forward.1} parent=1 // pred_fallthru
      _
    %439 = vsyncpa [#allocation4], 1

</llo_original>
